<compile_context>
chip_gen: v6e
topology: v6e:2x2x1
jax: 0.10.0
libtpu: 0.0.40
codegen_flags: <defaults>
</compile_context>

<pallas_src>
import functools

import jax
import jax.numpy as jnp
import numpy as np
from jax.experimental import pallas as pl
from jax.experimental.pallas import tpu as pltpu

EPS = 1e-8  # SimpleRMSNorm eps


def hgru_kernel(lb_ref, x_ref, w_in_ref, w_out_ref, o_ref,
                h_carry, gate_s, *, approx_recip):
    # x_ref: (1, TN, D) tile of one batch element.
    TN = x_ref.shape[1]
    D = x_ref.shape[2]

    # Reset the carried hidden state at the start of every sequence.
    @pl.when(pl.program_id(1) == 0)
    def _():
        h_carry[...] = jnp.zeros_like(h_carry)

    x = x_ref[0]                                                  # (TN, D)

    # --- fused input projections: one MXU pass of width 3D ---
    proj = jnp.dot(x, w_in_ref[...], preferred_element_type=jnp.float32)

    cand = jax.nn.silu(proj[:, :D])                               # (TN, D) f32
    gate_s[...] = jax.nn.sigmoid(proj[:, D:2 * D])                # park out-gate in VMEM
    lb = lb_ref[0]
    lam = lb + (1.0 - lb) * jax.nn.sigmoid(proj[:, 2 * D:])       # forget gate
    u = (1.0 - lam) * cand                                        # recurrence input

    # --- vectorized causal recurrence over the tile ---
    # h_t = lam_t * h_{t-1} + u_t  ==>  h_t = a_t * h_carry + b_t with
    #   a_t = prod_{i<=t} lam_i,  b_t = inclusive scan of (lam, u) under
    #   the affine composition (A2, B2) o (A1, B1) = (A2*A1, A2*B1 + B2).
    # Hillis-Steele inclusive scan along the time (sublane) axis; the roll's
    # wrap-around rows are masked to the identity element (1, 0).
    row = jax.lax.broadcasted_iota(jnp.int32, (TN, D), 0)
    a, b = lam, u
    s = 1
    while s < TN:                                                 # log2(TN) steps
        valid = row >= s
        a_sh = jnp.where(valid, pltpu.roll(a, shift=s, axis=0), 1.0)
        b_sh = jnp.where(valid, pltpu.roll(b, shift=s, axis=0), 0.0)
        b = a * b_sh + b          # combine(left=(a_sh,b_sh), right=(a,b))
        a = a * a_sh
        s *= 2

    h = a * h_carry[...] + b                                      # (TN, D)
    h_carry[...] = h[TN - 1:TN, :]                                # carry to next tile

    # --- output gate + SimpleRMSNorm + output projection ---
    gated = h * gate_s[...]
    rms = jnp.sqrt(jnp.sum(gated * gated, axis=-1, keepdims=True) * (1.0 / D))
    normed = gated * pl.reciprocal(rms + EPS, approx=approx_recip)
    out = jnp.dot(normed.astype(w_out_ref.dtype), w_out_ref[...],
                  preferred_element_type=jnp.float32)
    o_ref[0] = out.astype(o_ref.dtype)
    # TODO(synk): for production, keep D a multiple of 128 (lane-dense output
    # stores); D < 128 (as in the tiny test) falls back to masked stores.


@functools.partial(jax.jit, static_argnames=("seq_tile", "mxu_dtype"))
def hgru_module_forward(query, w_cand, w_gate, w_lam, w_out, lower_bound,
                        *, seq_tile=None, mxu_dtype=None):
    """query: (N, B, D) fairseq layout. Returns (N, B, D).

    seq_tile : time-tile length TN (must divide N); None -> auto.
    mxu_dtype: e.g. jnp.bfloat16 to run the matmuls in bf16 (f32 accumulate,
               f32 elementwise/recurrence); None -> keep input dtype.
    """
    N, B, D = query.shape
    x = jnp.transpose(query, (1, 0, 2))                           # (B, N, D)

    if seq_tile is None:
        seq_tile = next((t for t in (256, 128, 64, 32, 16, 8) if N % t == 0), N)
    TN = seq_tile
    assert N % TN == 0, "seq_tile must divide the sequence length"
    n_tiles = N // TN

    # Fuse the three input projections into one (D, 3D) weight.
    w_in = jnp.concatenate([w_cand, w_gate, w_lam], axis=1)       # (D, 3D)
    w_o = w_out
    if mxu_dtype is not None:
        x = x.astype(mxu_dtype)
        w_in = w_in.astype(mxu_dtype)
        w_o = w_o.astype(mxu_dtype)

    lb = jnp.asarray(lower_bound, jnp.float32).reshape((1,))

    kernel = functools.partial(hgru_kernel,
                               approx_recip=(mxu_dtype is not None))

    out = pl.pallas_call(
        kernel,
        out_shape=jax.ShapeDtypeStruct((B, N, D), query.dtype),
        grid=(B, n_tiles),
        in_specs=[
            pl.BlockSpec(memory_space=pltpu.MemorySpace.SMEM),        # lower_bound
            pl.BlockSpec((1, TN, D), lambda b, n: (b, n, 0)),         # x tile
            pl.BlockSpec((D, 3 * D), lambda b, n: (0, 0)),            # fused in-proj
            pl.BlockSpec((D, D), lambda b, n: (0, 0)),                # out-proj
        ],
        out_specs=pl.BlockSpec((1, TN, D), lambda b, n: (b, n, 0)),
        scratch_shapes=[
            pltpu.VMEM((1, D), jnp.float32),    # hidden-state carry across N tiles
            pltpu.VMEM((TN, D), jnp.float32),   # out-gate parking (avoid live spills)
        ],
        compiler_params=pltpu.CompilerParams(
            dimension_semantics=("parallel", "arbitrary"),
            vmem_limit_bytes=48 * 1024 * 1024),
    )(lb, x, w_in, w_o)

    return jnp.transpose(out, (1, 0, 2))                           # back to (N, B, D)


def hgru_reference(query, w_cand, w_gate, w_lam, w_out, lower_bound):
    """Pure-JAX reference (same math, sequential scan over time)."""
    x = jnp.transpose(query, (1, 0, 2)).astype(jnp.float32)       # (B, N, D)
    D = x.shape[-1]
    cand = jax.nn.silu(x @ w_cand)
    out_gate = jax.nn.sigmoid(x @ w_gate)
    lam = jax.nn.sigmoid(x @ w_lam)
    lam = lower_bound + (1.0 - lower_bound) * lam
    inp = (1.0 - lam) * cand

    def step(h, xs):
        lam_t, inp_t = xs
        h = lam_t * h + inp_t
        return h, h

    _, h = jax.lax.scan(step, jnp.zeros((x.shape[0], D), jnp.float32),
                        (jnp.swapaxes(lam, 0, 1), jnp.swapaxes(inp, 0, 1)))
    h = jnp.swapaxes(h, 0, 1)                                     # (B, N, D)
    gated = h * out_gate
    rms = jnp.sqrt(jnp.mean(gated * gated, axis=-1, keepdims=True))
    normed = gated / (rms + EPS)
    out = normed @ w_out
    return jnp.transpose(out, (1, 0, 2))


def _make_inputs(key, N, B, D):
    kq, k1, k2, k3, k4 = jax.random.split(key, 5)
    query = jax.random.normal(kq, (N, B, D), dtype=jnp.float32)
    bound = 1.0 / np.sqrt(D)
    w_cand = jax.random.uniform(k1, (D, D), jnp.float32, -bound, bound)
    w_gate = jax.random.uniform(k2, (D, D), jnp.float32, -bound, bound)
    w_lam = jax.random.uniform(k3, (D, D), jnp.float32, -bound, bound)
    w_out = jax.random.uniform(k4, (D, D), jnp.float32, -bound, bound)
    return query, w_cand, w_gate, w_lam, w_out


if __name__ == "__main__":
    lower_bound = jnp.float32(0.1)   # per-layer lower bound on the forget gate

    # 1) Module-sized small shapes (fairseq layout N, B, D): seq=8, batch=2, dim=32.
    args = _make_inputs(jax.random.PRNGKey(0), 8, 2, 32)
    out = jax.block_until_ready(hgru_module_forward(*args, lower_bound))
    ref = hgru_reference(*args, lower_bound)
    np.testing.assert_allclose(np.asarray(out), np.asarray(ref),
                               rtol=1e-5, atol=1e-5)

    # 2) Tiled sequence path (multiple N tiles -> exercises the carried state).
    args2 = _make_inputs(jax.random.PRNGKey(1), 128, 2, 128)
    out2 = jax.block_until_ready(
        hgru_module_forward(*args2, lower_bound, seq_tile=32))
    ref2 = hgru_reference(*args2, lower_bound)
    np.testing.assert_allclose(np.asarray(out2), np.asarray(ref2),
                               rtol=1e-4, atol=1e-4)

    # 3) bf16 MXU path (f32 accumulation + f32 elementwise/recurrence).
    out3 = jax.block_until_ready(
        hgru_module_forward(*args2, lower_bound, seq_tile=32,
                            mxu_dtype=jnp.bfloat16))
    np.testing.assert_allclose(np.asarray(out3), np.asarray(ref2),
                               rtol=1e-1, atol=1e-1)

    # TODO(synk): incremental_state / key_padding_mask paths of HgruModule are
    # inference-decoding bookkeeping and are not part of this forward kernel.
    print("KERNEL_OK")
</pallas_src>

<mosaic_0001>
module attributes {stable_mosaic.version = 11 : i64} {
  func.func @hgru_kernel(%arg0: i32, %arg1: i32, %arg2: memref<1xf32, #tpu.memory_space<smem>>, %arg3: memref<1x8x32xf32, #tpu.memory_space<vmem>>, %arg4: memref<32x96xf32, #tpu.memory_space<vmem>>, %arg5: memref<32x32xf32, #tpu.memory_space<vmem>>, %arg6: memref<1x8x32xf32, #tpu.memory_space<vmem>>, %arg7: memref<1x32xf32, #tpu.memory_space<vmem>>, %arg8: memref<8x32xf32, #tpu.memory_space<vmem>>) attributes {dimension_semantics = [#tpu.dimension_semantics<parallel>, #tpu.dimension_semantics<arbitrary>], iteration_bounds = array<i64: 2, 1>, scalar_prefetch = 0 : i64, scratch_operands = 2 : i64, tpu.core_type = #tpu.core_type<tc>, window_params = [{transform_indices = @transform_0, window_bounds = array<i64: 1>}, {transform_indices = @transform_1, window_bounds = array<i64: 1, 8, 32>}, {pipeline_mode = #tpu.pipeline_mode<synchronous>, transform_indices = @transform_2, window_bounds = array<i64: 32, 96>}, {pipeline_mode = #tpu.pipeline_mode<synchronous>, transform_indices = @transform_3, window_bounds = array<i64: 32, 32>}, {transform_indices = @transform_4, window_bounds = array<i64: 1, 8, 32>}]} {
    %c0_i32 = arith.constant 0 : i32
    %0 = arith.cmpi eq, %arg1, %c0_i32 : i32
    %1 = arith.extui %0 : i1 to i32
    %c0_i32_0 = arith.constant 0 : i32
    %2 = arith.cmpi ne, %1, %c0_i32_0 : i32
    scf.if %2 {
      %cst_40 = arith.constant 0.000000e+00 : f32
      %94 = vector.broadcast %cst_40 : f32 to vector<1x32xf32>
      %c0_41 = arith.constant 0 : index
      %c0_42 = arith.constant 0 : index
      %95 = vector.load %arg7[%c0_41, %c0_42] : memref<1x32xf32, #tpu.memory_space<vmem>>, vector<1x32xf32>
      tpu.vector_store %arg7[%c0_41, %c0_42], %94 {strides = array<i32>} : memref<1x32xf32, #tpu.memory_space<vmem>>, vector<1x32xf32>,
    } else {
    }
    %c0 = arith.constant 0 : index
    %c0_1 = arith.constant 0 : index
    %c0_2 = arith.constant 0 : index
    %3 = vector.load %arg3[%c0, %c0_1, %c0_2] : memref<1x8x32xf32, #tpu.memory_space<vmem>>, vector<1x8x32xf32>
    %4 = vector.shape_cast %3 : vector<1x8x32xf32> to vector<8x32xf32>
    %c0_3 = arith.constant 0 : index
    %c0_4 = arith.constant 0 : index
    %5 = vector.load %arg4[%c0_3, %c0_4] : memref<32x96xf32, #tpu.memory_space<vmem>>, vector<32x96xf32>
    %cst = arith.constant dense<0.000000e+00> : vector<8x96xf32>
    %6 = tpu.matmul %4, %5, %cst {dimension_numbers = #tpu.dot_dimension_numbers<[1], [0], [0], [1], [0, 0, 1, 1], [], []>} : vector<8x32xf32>, vector<32x96xf32>, vector<8x96xf32> -> vector<8x96xf32>
    %7 = vector.extract_strided_slice %6 {offsets = [0, 0], sizes = [8, 32], strides = [1, 1]} : vector<8x96xf32> to vector<8x32xf32>
    %8 = arith.negf %7 : vector<8x32xf32>
    %9 = math.exp %8 : vector<8x32xf32>
    %cst_5 = arith.constant 1.000000e+00 : f32
    %10 = vector.broadcast %cst_5 : f32 to vector<8x32xf32>
    %11 = arith.addf %10, %9 : vector<8x32xf32>
    %12 = arith.divf %10, %11 : vector<8x32xf32>
    %13 = arith.mulf %7, %12 : vector<8x32xf32>
    %14 = vector.extract_strided_slice %6 {offsets = [0, 32], sizes = [8, 32], strides = [1, 1]} : vector<8x96xf32> to vector<8x32xf32>
    %15 = arith.negf %14 : vector<8x32xf32>
    %16 = math.exp %15 : vector<8x32xf32>
    %cst_6 = arith.constant 1.000000e+00 : f32
    %17 = vector.broadcast %cst_6 : f32 to vector<8x32xf32>
    %18 = arith.addf %17, %16 : vector<8x32xf32>
    %19 = arith.divf %17, %18 : vector<8x32xf32>
    %c0_7 = arith.constant 0 : index
    %c0_8 = arith.constant 0 : index
    %20 = vector.load %arg8[%c0_7, %c0_8] : memref<8x32xf32, #tpu.memory_space<vmem>>, vector<8x32xf32>
    tpu.vector_store %arg8[%c0_7, %c0_8], %19 {strides = array<i32>} : memref<8x32xf32, #tpu.memory_space<vmem>>, vector<8x32xf32>,
    %c0_9 = arith.constant 0 : index
    %21 = memref.load %arg2[%c0_9] : memref<1xf32, #tpu.memory_space<smem>>
    %cst_10 = arith.constant 1.000000e+00 : f32
    %22 = arith.subf %cst_10, %21 : f32
    %23 = vector.extract_strided_slice %6 {offsets = [0, 64], sizes = [8, 32], strides = [1, 1]} : vector<8x96xf32> to vector<8x32xf32>
    %24 = arith.negf %23 : vector<8x32xf32>
    %25 = math.exp %24 : vector<8x32xf32>
    %cst_11 = arith.constant 1.000000e+00 : f32
    %26 = vector.broadcast %cst_11 : f32 to vector<8x32xf32>
    %27 = arith.addf %26, %25 : vector<8x32xf32>
    %28 = arith.divf %26, %27 : vector<8x32xf32>
    %29 = vector.broadcast %22 : f32 to vector<8x32xf32>
    %30 = arith.mulf %29, %28 : vector<8x32xf32>
    %31 = vector.broadcast %21 : f32 to vector<8x32xf32>
    %32 = arith.addf %31, %30 : vector<8x32xf32>
    %cst_12 = arith.constant 1.000000e+00 : f32
    %33 = vector.broadcast %cst_12 : f32 to vector<8x32xf32>
    %34 = arith.subf %33, %32 : vector<8x32xf32>
    %35 = arith.mulf %34, %13 : vector<8x32xf32>
    %36 = tpu.iota {dimensions = array<i32: 0>} : vector<8x32xi32>
    %c1_i32 = arith.constant 1 : i32
    %37 = vector.broadcast %c1_i32 : i32 to vector<8x32xi32>
    %38 = arith.cmpi sge, %36, %37 : vector<8x32xi32>
    %c1_i32_13 = arith.constant 1 : i32
    %39 = tpu.dynamic_rotate %32 by %c1_i32_13 dim 0 : vector<8x32xf32>, i32 -> vector<8x32xf32>
    %cst_14 = arith.constant 1.000000e+00 : f32
    %40 = vector.broadcast %cst_14 : f32 to vector<8x32xf32>
    %41 = arith.select %38, %39, %40 : vector<8x32xi1>, vector<8x32xf32>
    %c1_i32_15 = arith.constant 1 : i32
    %42 = tpu.dynamic_rotate %35 by %c1_i32_15 dim 0 : vector<8x32xf32>, i32 -> vector<8x32xf32>
    %cst_16 = arith.constant 0.000000e+00 : f32
    %43 = vector.broadcast %cst_16 : f32 to vector<8x32xf32>
    %44 = arith.select %38, %42, %43 : vector<8x32xi1>, vector<8x32xf32>
    %45 = arith.mulf %32, %44 : vector<8x32xf32>
    %46 = arith.addf %45, %35 : vector<8x32xf32>
    %47 = arith.mulf %32, %41 : vector<8x32xf32>
    %c2_i32 = arith.constant 2 : i32
    %48 = vector.broadcast %c2_i32 : i32 to vector<8x32xi32>
    %49 = arith.cmpi sge, %36, %48 : vector<8x32xi32>
    %c2_i32_17 = arith.constant 2 : i32
    %50 = tpu.dynamic_rotate %47 by %c2_i32_17 dim 0 : vector<8x32xf32>, i32 -> vector<8x32xf32>
    %cst_18 = arith.constant 1.000000e+00 : f32
    %51 = vector.broadcast %cst_18 : f32 to vector<8x32xf32>
    %52 = arith.select %49, %50, %51 : vector<8x32xi1>, vector<8x32xf32>
    %c2_i32_19 = arith.constant 2 : i32
    %53 = tpu.dynamic_rotate %46 by %c2_i32_19 dim 0 : vector<8x32xf32>, i32 -> vector<8x32xf32>
    %cst_20 = arith.constant 0.000000e+00 : f32
    %54 = vector.broadcast %cst_20 : f32 to vector<8x32xf32>
    %55 = arith.select %49, %53, %54 : vector<8x32xi1>, vector<8x32xf32>
    %56 = arith.mulf %47, %55 : vector<8x32xf32>
    %57 = arith.addf %56, %46 : vector<8x32xf32>
    %58 = arith.mulf %47, %52 : vector<8x32xf32>
    %c4_i32 = arith.constant 4 : i32
    %59 = vector.broadcast %c4_i32 : i32 to vector<8x32xi32>
    %60 = arith.cmpi sge, %36, %59 : vector<8x32xi32>
    %c4_i32_21 = arith.constant 4 : i32
    %61 = tpu.dynamic_rotate %58 by %c4_i32_21 dim 0 : vector<8x32xf32>, i32 -> vector<8x32xf32>
    %cst_22 = arith.constant 1.000000e+00 : f32
    %62 = vector.broadcast %cst_22 : f32 to vector<8x32xf32>
    %63 = arith.select %60, %61, %62 : vector<8x32xi1>, vector<8x32xf32>
    %c4_i32_23 = arith.constant 4 : i32
    %64 = tpu.dynamic_rotate %57 by %c4_i32_23 dim 0 : vector<8x32xf32>, i32 -> vector<8x32xf32>
    %cst_24 = arith.constant 0.000000e+00 : f32
    %65 = vector.broadcast %cst_24 : f32 to vector<8x32xf32>
    %66 = arith.select %60, %64, %65 : vector<8x32xi1>, vector<8x32xf32>
    %67 = arith.mulf %58, %66 : vector<8x32xf32>
    %68 = arith.addf %67, %57 : vector<8x32xf32>
    %69 = arith.mulf %58, %63 : vector<8x32xf32>
    %c0_25 = arith.constant 0 : index
    %c0_26 = arith.constant 0 : index
    %70 = vector.load %arg7[%c0_25, %c0_26] : memref<1x32xf32, #tpu.memory_space<vmem>>, vector<1x32xf32>
    %71 = vector.broadcast %70 : vector<1x32xf32> to vector<8x32xf32>
    %72 = arith.mulf %69, %71 : vector<8x32xf32>
    %73 = arith.addf %72, %68 : vector<8x32xf32>
    %74 = vector.extract_strided_slice %73 {offsets = [7, 0], sizes = [1, 32], strides = [1, 1]} : vector<8x32xf32> to vector<1x32xf32>
    %c0_27 = arith.constant 0 : index
    %c0_28 = arith.constant 0 : index
    %75 = vector.load %arg7[%c0_27, %c0_28] : memref<1x32xf32, #tpu.memory_space<vmem>>, vector<1x32xf32>
    tpu.vector_store %arg7[%c0_27, %c0_28], %74 {strides = array<i32>} : memref<1x32xf32, #tpu.memory_space<vmem>>, vector<1x32xf32>,
    %c0_29 = arith.constant 0 : index
    %c0_30 = arith.constant 0 : index
    %76 = vector.load %arg8[%c0_29, %c0_30] : memref<8x32xf32, #tpu.memory_space<vmem>>, vector<8x32xf32>
    %77 = arith.mulf %73, %76 : vector<8x32xf32>
    %78 = arith.mulf %77, %77 : vector<8x32xf32>
    %cst_31 = arith.constant dense<0.000000e+00> : vector<8xf32>
    %79 = vector.multi_reduction <add>, %78, %cst_31 [1] : vector<8x32xf32> to vector<8xf32>
    %80 = vector.shape_cast %79 : vector<8xf32> to vector<8x1xf32>
    %cst_32 = arith.constant 3.125000e-02 : f32
    %81 = vector.broadcast %cst_32 : f32 to vector<8x1xf32>
    %82 = arith.mulf %80, %81 : vector<8x1xf32>
    %83 = math.sqrt %82 : vector<8x1xf32>
    %cst_33 = arith.constant 9.99999993E-9 : f32
    %84 = vector.broadcast %cst_33 : f32 to vector<8x1xf32>
    %85 = arith.addf %83, %84 : vector<8x1xf32>
    %86 = tpu.reciprocal %85 : vector<8x1xf32> -> vector<8x1xf32>
    %87 = vector.broadcast %86 : vector<8x1xf32> to vector<8x32xf32>
    %88 = arith.mulf %77, %87 : vector<8x32xf32>
    %c0_34 = arith.constant 0 : index
    %c0_35 = arith.constant 0 : index
    %89 = vector.load %arg5[%c0_34, %c0_35] : memref<32x32xf32, #tpu.memory_space<vmem>>, vector<32x32xf32>
    %cst_36 = arith.constant dense<0.000000e+00> : vector<8x32xf32>
    %90 = tpu.matmul %88, %89, %cst_36 {dimension_numbers = #tpu.dot_dimension_numbers<[1], [0], [0], [1], [0, 0, 1, 1], [], []>} : vector<8x32xf32>, vector<32x32xf32>, vector<8x32xf32> -> vector<8x32xf32>
    %c0_37 = arith.constant 0 : index
    %c0_38 = arith.constant 0 : index
    %c0_39 = arith.constant 0 : index
    %91 = vector.load %arg6[%c0_37, %c0_38, %c0_39] : memref<1x8x32xf32, #tpu.memory_space<vmem>>, vector<1x8x32xf32>
    %92 = vector.shape_cast %91 : vector<1x8x32xf32> to vector<8x32xf32>
    %93 = vector.shape_cast %90 : vector<8x32xf32> to vector<1x8x32xf32>
    tpu.vector_store %arg6[%c0_37, %c0_38, %c0_39], %93 {strides = array<i32>} : memref<1x8x32xf32, #tpu.memory_space<vmem>>, vector<1x8x32xf32>,
    return
  }
  func.func @transform_0(%arg0: i32, %arg1: i32) -> i32 {
    %c0_i32 = arith.constant 0 : i32
    %c0_i32_0 = arith.constant 0 : i32
    return %c0_i32 : i32
  }
  func.func @transform_1(%arg0: i32, %arg1: i32) -> (i32, i32, i32) {
    %c0_i32 = arith.constant 0 : i32
    %c0_i32_0 = arith.constant 0 : i32
    return %arg0, %arg1, %c0_i32 : i32, i32, i32
  }
  func.func @transform_2(%arg0: i32, %arg1: i32) -> (i32, i32) {
    %c0_i32 = arith.constant 0 : i32
    %c0_i32_0 = arith.constant 0 : i32
    %c0_i32_1 = arith.constant 0 : i32
    return %c0_i32, %c0_i32_0 : i32, i32
  }
  func.func @transform_3(%arg0: i32, %arg1: i32) -> (i32, i32) {
    %c0_i32 = arith.constant 0 : i32
    %c0_i32_0 = arith.constant 0 : i32
    %c0_i32_1 = arith.constant 0 : i32
    return %c0_i32, %c0_i32_0 : i32, i32
  }
  func.func @transform_4(%arg0: i32, %arg1: i32) -> (i32, i32, i32) {
    %c0_i32 = arith.constant 0 : i32
    %c0_i32_0 = arith.constant 0 : i32
    return %arg0, %arg1, %c0_i32 : i32, i32, i32
  }
}

</mosaic_0001>

<llo_original>
// kernel: hgru_module_forward.1
$region0: #{hgru_module_forward.1}
  #allocation0 [shape = 'u32[]', space=smem, size = 0x4, offset = 0x4, fixed_abs, tag = 'smem constant byte address 0x4 - core index']
  #allocation1 [shape = 'u32[144,128]{1,0:T(1,128)}', space=vmem, size = 0x12000, scoped, tag = 'internal scratch']
  #allocation2 [shape = 'f32[1,32]{1,0:T(1,128)}', space=vmem, size = 0x200, scoped, tag = 'scratch operand']
  #allocation3 [shape = 'f32[8,32]{1,0:T(8,128)}', space=vmem, size = 0x1000, scoped, tag = 'scratch operand']
  #allocation4 [shape = 'f32[1]{0:T(128)S(6)}', space=smem, size = 0x200, scoped, tag = 'scoped memory for hgru_module_forward.1']
  %s0 = inlined_call_operand.<no memory space> [shape: f32[1], index: 0, kind: input, shape index: {}]
  %s1 = inlined_call_operand.vmem [shape: f32[2,8,32], index: 1, kind: input, shape index: {}]
  %s2 = inlined_call_operand.vmem [shape: f32[32,96], index: 2, kind: input, shape index: {}]
  %s3 = inlined_call_operand.vmem [shape: f32[32,32], index: 3, kind: input, shape index: {}]
  %s4 = inlined_call_operand.vmem [shape: f32[2,8,32], index: 4, kind: output, shape index: {}]
  %s5 = sld [smem:[#allocation0]]
  $region53: #{hgru_module_forward.1} parent=0
    _
  %s7 = ssub.s32 1, %s5
  %s8 = scalar_select 0, %s7, %s5
  %9 = sst [smem:[#allocation4]] %s0
  loop: start=0, step=1, limit=4
  $region2: #{hgru_module_forward.1} parent=0 // loop_pre_header
    _
  $region3: #{hgru_module_forward.1} parent=0 // loop_header
    %s11 = sphi 0, %s15
    %p12 = scmp.ge.s32.totalorder %s11, 4
    %s18 = sphi 0, %s30
    %s19 = sphi 0, %s26
    %s20 = sphi 0, %s18
    %s21 = sphi 0, %s19
    %s22 = sphi 0, %s20
    %s23 = sphi 0, %s21
    %s31 = sphi 0, %s31
    %s33 = sphi 0, %s31
    %s34 = sphi 0, %s33
    %s48 = sphi 0, %s34
    %s56 = sphi 0, %s58
    %s59 = sphi 0, %s56
    %s60 = sphi 0, %s59
    %s76 = sphi 0, %s60
    %s80 = sphi 0, %s80
    %s82 = sphi 0, %s80
    %s83 = sphi 0, %s82
    %s97 = sphi 0, %s83
    %s101 = sphi 0, %s101
    %s103 = sphi 0, %s101
    %s104 = sphi 0, %s103
    %s118 = sphi 0, %s104
    %s126 = sphi 0, %s128
    %s129 = sphi 0, %s126
    %s130 = sphi 0, %s129
    %s146 = sphi 0, %s130
  $region4: #{hgru_module_forward.1} parent=0 // loop_header_branch
    %14 = sbr.rel (%p12) target = $region8
  $region5: #{hgru_module_forward.1} parent=0 // loop_body
    %s16 = ssub.s32 %s11, 1
    %s17 = ssub.s32 %s11, 2
    %s24 = sadd.s32 1, %s19
    %p25 = scmp.ge.s32.totalorder %s24, 1
    %s26 = scalar_select %p25, 0, %s24
    %s27 = sadd.s32 1, %s18
    %s28 = scalar_select %p25, %s27, %s18
    %p29 = scmp.ge.s32.totalorder %s28, 2
    %s30 = scalar_select %p29, 0, %s28
    %s32 = sadd.s32 %s31, 1
    %p35 = scmp.eq.s32.totalorder %s11, 1
    %p36 = scmp.ne.s32.totalorder %s31, %s33
    %p37 = scmp.eq.s32.totalorder %s11, 0
    %p38 = por %p36, %p37
    %p39 = scmp.ne.s32.totalorder %s31, %s33
    %p40 = scmp.eq.s32.totalorder %s16, 1
    %p41 = por %p39, %p40
    %p42 = scmp.ne.s32.totalorder %s33, %s34
    %p43 = scmp.eq.s32.totalorder %s16, 0
    %p44 = por %p42, %p43
    %p45 = scmp.ne.s32.totalorder %s33, %s34
    %p46 = scmp.eq.s32.totalorder %s17, 1
    %p47 = por %p45, %p46
    %p49 = scmp.ne.s32.totalorder %s34, %s48
    %p50 = scmp.eq.s32.totalorder %s17, 0
    %p51 = por %p49, %p50
    %s52 = ssub.s32 %s18, %s30
    %s53 = ssub.s32 %s19, %s26
    %s54 = sor.u32 %s52, %s53
    %p55 = scmp.eq.s32.totalorder %s54, 0
    %s57 = sadd.s32 %s56, 1
    %s58 = scalar_select %p55, %s56, %s57
    %p61 = pneg %p55
    %p62 = scmp.eq.s32.totalorder %s11, 1
    %p63 = por %p61, %p62
    %p64 = scmp.ne.s32.totalorder %s56, %s59
    %p65 = scmp.eq.s32.totalorder %s11, 0
    %p66 = por %p64, %p65
    %p67 = scmp.ne.s32.totalorder %s56, %s59
    %p68 = scmp.eq.s32.totalorder %s16, 1
    %p69 = por %p67, %p68
    %p70 = scmp.ne.s32.totalorder %s59, %s60
    %p71 = scmp.eq.s32.totalorder %s16, 0
    %p72 = por %p70, %p71
    %p73 = scmp.ne.s32.totalorder %s59, %s60
    %p74 = scmp.eq.s32.totalorder %s17, 1
    %p75 = por %p73, %p74
    %p77 = scmp.ne.s32.totalorder %s60, %s76
    %p78 = scmp.eq.s32.totalorder %s17, 0
    %p79 = por %p77, %p78
    %s81 = sadd.s32 %s80, 1
    %p84 = scmp.eq.s32.totalorder %s11, 1
    %p85 = scmp.ne.s32.totalorder %s80, %s82
    %p86 = scmp.eq.s32.totalorder %s11, 0
    %p87 = por %p85, %p86
    %p88 = scmp.ne.s32.totalorder %s80, %s82
    %p89 = scmp.eq.s32.totalorder %s16, 1
    %p90 = por %p88, %p89
    %p91 = scmp.ne.s32.totalorder %s82, %s83
    %p92 = scmp.eq.s32.totalorder %s16, 0
    %p93 = por %p91, %p92
    %p94 = scmp.ne.s32.totalorder %s82, %s83
    %p95 = scmp.eq.s32.totalorder %s17, 1
    %p96 = por %p94, %p95
    %p98 = scmp.ne.s32.totalorder %s83, %s97
    %p99 = scmp.eq.s32.totalorder %s17, 0
    %p100 = por %p98, %p99
    %s102 = sadd.s32 %s101, 1
    %p105 = scmp.eq.s32.totalorder %s11, 1
    %p106 = scmp.ne.s32.totalorder %s101, %s103
    %p107 = scmp.eq.s32.totalorder %s11, 0
    %p108 = por %p106, %p107
    %p109 = scmp.ne.s32.totalorder %s101, %s103
    %p110 = scmp.eq.s32.totalorder %s16, 1
    %p111 = por %p109, %p110
    %p112 = scmp.ne.s32.totalorder %s103, %s104
    %p113 = scmp.eq.s32.totalorder %s16, 0
    %p114 = por %p112, %p113
    %p115 = scmp.ne.s32.totalorder %s103, %s104
    %p116 = scmp.eq.s32.totalorder %s17, 1
    %p117 = por %p115, %p116
    %p119 = scmp.ne.s32.totalorder %s104, %s118
    %p120 = scmp.eq.s32.totalorder %s17, 0
    %p121 = por %p119, %p120
    %s122 = ssub.s32 %s18, %s30
    %s123 = ssub.s32 %s19, %s26
    %s124 = sor.u32 %s122, %s123
    %p125 = scmp.eq.s32.totalorder %s124, 0
    %s127 = sadd.s32 %s126, 1
    %s128 = scalar_select %p125, %s126, %s127
    %p131 = pneg %p125
    %p132 = scmp.eq.s32.totalorder %s11, 1
    %p133 = por %p131, %p132
    %p134 = scmp.ne.s32.totalorder %s126, %s129
    %p135 = scmp.eq.s32.totalorder %s11, 0
    %p136 = por %p134, %p135
    %p137 = scmp.ne.s32.totalorder %s126, %s129
    %p138 = scmp.eq.s32.totalorder %s16, 1
    %p139 = por %p137, %p138
    %p140 = scmp.ne.s32.totalorder %s129, %s130
    %p141 = scmp.eq.s32.totalorder %s16, 0
    %p142 = por %p140, %p141
    %p143 = scmp.ne.s32.totalorder %s129, %s130
    %p144 = scmp.eq.s32.totalorder %s17, 1
    %p145 = por %p143, %p144
    %p147 = scmp.ne.s32.totalorder %s130, %s146
    %p148 = scmp.eq.s32.totalorder %s17, 0
    %p149 = por %p147, %p148
    %p150 = scmp.le.s32.totalorder 1, %s11
    %p151 = scmp.lt.s32.totalorder %s11, 3
    %p152 = pnand %p150, %p151
    %p153 = pneg %p152
    // Predicated region
    $region9: #{hgru_module_forward.1} parent=5 // pred_check
      _
    $region10: #{hgru_module_forward.1} parent=5 // pred_check_branch
      %155 = sbr.rel (%p152) target = $region12
    $region11: #{hgru_module_forward.1} parent=5 // pred_region
      %s156 = ssub.s32 %s11, 1
      // Predicated region
      $region13: #{hgru_module_forward.1} parent=11 // pred_check
        %p157 = pneg %p44
      $region14: #{hgru_module_forward.1} parent=11 // pred_check_branch
        %159 = sbr.rel (%p157) target = $region16
      $region15: #{hgru_module_forward.1} parent=11 // pred_region
        _
      $region16: #{hgru_module_forward.1} parent=11 // pred_fallthru
        _
      // Predicated region
      $region17: #{hgru_module_forward.1} parent=11 // pred_check
        %p160 = pneg %p93
      $region18: #{hgru_module_forward.1} parent=11 // pred_check_branch
        %162 = sbr.rel (%p160) target = $region20
      $region19: #{hgru_module_forward.1} parent=11 // pred_region
        _
      $region20: #{hgru_module_forward.1} parent=11 // pred_fallthru
        _
      // Predicated region
      $region21: #{hgru_module_forward.1} parent=11 // pred_check
        %p163 = pneg %p114
      $region22: #{hgru_module_forward.1} parent=11 // pred_check_branch
        %165 = sbr.rel (%p163) target = $region24
      $region23: #{hgru_module_forward.1} parent=11 // pred_region
        _
      $region24: #{hgru_module_forward.1} parent=11 // pred_fallthru
        _
    $region12: #{hgru_module_forward.1} parent=5 // pred_fallthru
      _
    %p166 = scmp.lt.s32.totalorder %s11, 2
    // Predicated region
    $region25: #{hgru_module_forward.1} parent=5 // pred_check
      %p167 = pneg %p166
    $region26: #{hgru_module_forward.1} parent=5 // pred_check_branch
      %169 = sbr.rel (%p167) target = $region28
    $region27: #{hgru_module_forward.1} parent=5 // pred_region
      // Predicated region
      $region29: #{hgru_module_forward.1} parent=27 // pred_check
        %p170 = pneg %p66
      $region30: #{hgru_module_forward.1} parent=27 // pred_check_branch
        %172 = sbr.rel (%p170) target = $region32
      $region31: #{hgru_module_forward.1} parent=27 // pred_region
        %p173 = scmp.lt.s32.totalorder %s18, 1
        %s174 = scalar_select %p173, %s18, 1
        %p175 = scmp.lt.s32.totalorder %s19, 0
        %s176 = scalar_select %p175, %s19, 0
        %s177 = sadd.s32 %s176, %s174
        %s178 = smul.addr %s177, 8
        %s179 = scalar_lea.vmem %s1, %s178
      $region32: #{hgru_module_forward.1} parent=27 // pred_fallthru
        _
    $region28: #{hgru_module_forward.1} parent=5 // pred_fallthru
      _
    %p180 = scmp.le.s32.totalorder 1, %s11
    %p181 = scmp.lt.s32.totalorder %s11, 3
    %p182 = pnand %p180, %p181
    %p183 = pneg %p182
    // Predicated region
    $region33: #{hgru_module_forward.1} parent=5 // pred_check
      _
    $region34: #{hgru_module_forward.1} parent=5 // pred_check_branch
      %185 = sbr.rel (%p182) target = $region36
    $region35: #{hgru_module_forward.1} parent=5 // pred_region
      %s186 = ssub.s32 %s11, 1
      %p187 = pneg %p44
      %p188 = pneg %p41
      %p189 = scmp.lt.s32.totalorder %s20, 1
      %s190 = scalar_select %p189, %s20, 1
      %p191 = scmp.lt.s32.totalorder %s21, 0
      %s192 = scalar_select %p191, %s21, 0
      %s193 = sadd.s32 %s192, %s190
      %s194 = smul.addr %s193, 8
      %s195 = scalar_lea.vmem %s1, %s194
      %p196 = pneg %p72
      %p197 = pneg %p69
      %p198 = pneg %p93
      %p199 = pneg %p90
      %p200 = pneg %p114
      %p201 = pneg %p111
      %p202 = pneg %p142
      %p203 = pneg %p139
      %p204 = scmp.lt.s32.totalorder %s20, 1
      %s205 = scalar_select %p204, %s20, 1
      %p206 = scmp.lt.s32.totalorder %s21, 0
      %s207 = scalar_select %p206, %s21, 0
      %s208 = sadd.s32 %s207, %s205
      %s209 = smul.addr %s208, 8
      %s210 = scalar_lea.vmem %s4, %s209
      %p211 = scmp.lt.s32.totalorder %s20, 1
      %s212 = scalar_select %p211, %s20, 1
      %p213 = scmp.lt.s32.totalorder %s21, 0
      %s214 = scalar_select %p213, %s21, 0
      %s215 = sadd.s32 %s214, %s212
      %s216 = smul.addr %s215, 8
      %s217 = scalar_lea.vmem %s1, %s216
      %p218 = scmp.lt.s32.totalorder %s20, 1
      %s219 = scalar_select %p218, %s20, 1
      %p220 = scmp.lt.s32.totalorder %s21, 0
      %s221 = scalar_select %p220, %s21, 0
      %s222 = sadd.s32 %s221, %s219
      %s223 = smul.addr %s222, 8
      %s224 = scalar_lea.vmem %s4, %s223
      %p225 = scmp.eq.s32.totalorder %s21, 0
      // Predicated region
      $region37: #{hgru_module_forward.1} parent=35 // pred_check
        %p226 = pneg %p225
      $region38: #{hgru_module_forward.1} parent=35 // pred_check_branch
        %228 = sbr.rel (%p226) target = $region40
      $region39: #{hgru_module_forward.1} parent=35 // pred_region
        %vm229 = vcmask 253952
        %230 = vst.msk [vmem:[#allocation2] sm:$0x1] %vm229, 0.0
      $region40: #{hgru_module_forward.1} parent=35 // pred_fallthru
        _
      %v231 = vld [vmem:[%s217] sm:$0xff]
      %v232 = vld [vmem:[%s2] sm:$0xff]
      %v233 = vld [vmem:[%s2 + $0x8] sm:$0xff]
      %v234 = vld [vmem:[%s2 + $0x10] sm:$0xff]
      %v235 = vld [vmem:[%s2 + $0x18] sm:$0xff]
      %vm236 = vcmask 261120
      %v238 = vsel %vm236, %v231, 0
      %240 = vmatprep.subr.mxu0 0.0
      %241 = vmatpush1.msra.mxu0 0.0
      %242 = vmatprep.subr.mxu0 0.0
      %243 = vmatpush1.msra.mxu0 0.0
      %244 = vmatprep.subr.mxu0 0.0
      %245 = vmatpush1.msra.mxu0 0.0
      %246 = vmatprep.subr.mxu0 0.0
      %247 = vmatpush1.msra.mxu0 0.0
      %248 = vmatprep.subr.mxu0 0.0
      %249 = vmatpush1.msra.mxu0 0.0
      %250 = vmatprep.subr.mxu0 0.0
      %251 = vmatpush1.msra.mxu0 0.0
      %252 = vmatprep.subr.mxu0 0.0
      %253 = vmatpush1.msra.mxu0 0.0
      %254 = vmatprep.subr.mxu0 0.0
      %255 = vmatpush1.msra.mxu0 0.0
      %256 = vmatprep.subr.mxu0 0.0
      %257 = vmatpush1.msra.mxu0 0.0
      %258 = vmatprep.subr.mxu0 0.0
      %259 = vmatpush1.msra.mxu0 0.0
      %260 = vmatprep.subr.mxu0 0.0
      %261 = vmatpush1.msra.mxu0 0.0
      %262 = vmatprep.subr.mxu0 0.0
      %263 = vmatpush1.msra.mxu0 0.0
      %264 = vmatprep.subr.mxu0 0.0
      %265 = vmatpush1.msra.mxu0 %v235
      %266 = vmatprep.subr.mxu0 0.0
      %267 = vmatpush1.msra.mxu0 %v234
      %268 = vmatprep.subr.mxu0 0.0
      %269 = vmatpush1.msra.mxu0 %v233
      %270 = vmatprep.subr.mxu0 0.0
      %271 = vmatpush1.msra.mxu0 %v232
      %272 = vmatprep.subr.mxu0 0.0
      %273 = vmatpush2.msra.mxu0 0.0
      %274 = vmatprep.subr.mxu0 0.0
      %275 = vmatpush2.msra.mxu0 0.0
      %276 = vmatprep.subr.mxu0 0.0
      %277 = vmatpush2.msra.mxu0 0.0
      %278 = vmatprep.subr.mxu0 0.0
      %279 = vmatpush2.msra.mxu0 0.0
      %280 = vmatprep.subr.mxu0 0.0
      %281 = vmatpush2.msra.mxu0 0.0
      %282 = vmatprep.subr.mxu0 0.0
      %283 = vmatpush2.msra.mxu0 0.0
      %284 = vmatprep.subr.mxu0 0.0
      %285 = vmatpush2.msra.mxu0 0.0
      %286 = vmatprep.subr.mxu0 0.0
      %287 = vmatpush2.msra.mxu0 0.0
      %288 = vmatprep.subr.mxu0 0.0
      %289 = vmatpush2.msra.mxu0 0.0
      %290 = vmatprep.subr.mxu0 0.0
      %291 = vmatpush2.msra.mxu0 0.0
      %292 = vmatprep.subr.mxu0 0.0
      %293 = vmatpush2.msra.mxu0 0.0
      %294 = vmatprep.subr.mxu0 0.0
      %295 = vmatpush2.msra.mxu0 0.0
      %296 = vmatprep.subr.mxu0 0.0
      %297 = vmatpush2.msra.mxu0 0.0
      %298 = vmatprep.subr.mxu0 0.0
      %299 = vmatpush2.msra.mxu0 0.0
      %300 = vmatprep.subr.mxu0 0.0
      %301 = vmatpush2.msra.mxu0 0.0
      %302 = vmatprep.subr.mxu0 0.0
      %303 = vmatpush2.msra.mxu0 0.0
      %304 = vmatprep.mubr.f32.mxu0 0.0
      %305 = vmatmul.mubr.f32.gmra.mxu0 %v238
      %v306 = vpop.f32.mrf.mxu0
      %v307 = vadd.f32 0.0, %v306
      %v308 = vpop.f32.mrf.mxu0
      %309 = vdwg.mxu0
      %v310 = vxor.u32 %v307, 2147483648
      %v311 = vmul.f32 %v310, 1.442695
      %v312 = vpow.pop %v311
      %v313 = vadd.f32 %v312, 1.0
      %v314 = vrcp.pop %v313
      %v315 = vmul.f32 1.0, %v314
      %v316 = vmul.f32 %v307, %v315
      %318 = vrot.lane.b32.xlu0 %v315, 96
      %v319 = vpop.permute.xlu0 %318
      %321 = vst.msk [vmem:[#allocation3] sm:$0xff] %vm236, %v319
      %s322 = sld [smem:[#allocation4]]
      %s323 = ssub.f32 1.0, %s322
      %v324 = vstv %s323
      %v325 = vmul.f32 %v324, %v315
      %v326 = vstv %s322
      %v327 = vadd.f32 %v326, %v325
      %v328 = vsub.f32 1.0, %v327
      %330 = vrot.lane.b32.xlu0 %v316, 64
      %v331 = vpop.permute.xlu0 %330
      %v333 = vmul.f32 %v328, %v331
      %v334 = vlaneseq
      %v335 = vshrl.u32 %v334, 7
      %vm336 = vcmp.ge.s32.totalorder %v335, 1
      %338 = vrot.lane.b32.xlu0 %v327, 64
      %v339 = vpop.permute.xlu0 %338
      %v341 = vrot.slane %v339, 7
      %v342 = vsel %vm336, %v341, 1.0
      %344 = vrot.lane.b32.xlu0 %v333, 64
      %v345 = vpop.permute.xlu0 %344
      %v347 = vrot.slane %v345, 7
      %v348 = vsel %vm336, %v347, 0.0
      %350 = vrot.lane.b32.xlu0 %v348, 64
      %v351 = vpop.permute.xlu0 %350
      %v353 = vmul.f32 %v327, %v351
      %v354 = vadd.f32 %v353, %v333
      %356 = vrot.lane.b32.xlu0 %v342, 64
      %v357 = vpop.permute.xlu0 %356
      %v359 = vmul.f32 %v327, %v357
      %vm360 = vcmp.ge.s32.totalorder %v335, 2
      %362 = vrot.lane.b32.xlu0 %v359, 64
      %v363 = vpop.permute.xlu0 %362
      %v365 = vrot.slane %v363, 6
      %v366 = vsel %vm360, %v365, 1.0
      %368 = vrot.lane.b32.xlu0 %v354, 64
      %v369 = vpop.permute.xlu0 %368
      %v371 = vrot.slane %v369, 6
      %v372 = vsel %vm360, %v371, 0.0
      %374 = vrot.lane.b32.xlu0 %v372, 64
      %v375 = vpop.permute.xlu0 %374
      %v377 = vmul.f32 %v359, %v375
      %v378 = vadd.f32 %v377, %v354
      %380 = vrot.lane.b32.xlu0 %v366, 64
      %v381 = vpop.permute.xlu0 %380
      %v383 = vmul.f32 %v359, %v381
      %vm384 = vcmp.ge.s32.totalorder %v335, 4
      %386 = vrot.lane.b32.xlu0 %v383, 64
      %v387 = vpop.permute.xlu0 %386
      %v389 = vrot.slane %v387, 4
      %v390 = vsel %vm384, %v389, 1.0
      %392 = vrot.lane.b32.xlu0 %v378, 64
      %v393 = vpop.permute.xlu0 %392
      %v395 = vrot.slane %v393, 4
      %v396 = vsel %vm384, %v395, 0.0
      %398 = vrot.lane.b32.xlu0 %v396, 64
      %v399 = vpop.permute.xlu0 %398
      %v401 = vmul.f32 %v383, %v399
      %v402 = vadd.f32 %v401, %v378
      %404 = vrot.lane.b32.xlu0 %v390, 64
      %v405 = vpop.permute.xlu0 %404
      %v407 = vmul.f32 %v383, %v405
      %v408 = vld [vmem:[#allocation2] sm:$0x1]
      %v410 = vlaneseq
      %v411 = vshrl.u32 %v410, 7
      %v412 = vsub.s32 0, %v411
      %v413 = vrot.slane %v408, %v412
      %414 = vrot.lane.b32.xlu0 %v413, 64
      %v415 = vpop.permute.xlu0 %414
      %v417 = vmul.f32 %v407, %v415
      %v418 = vadd.f32 %v417, %v402
      %420 = vrot.lane.b32.xlu0 %v418, 64
      %v421 = vpop.permute.xlu0 %420
      %vm423 = vcmask 261127
      %424 = vst.msk [vmem:[#allocation2 - $0x7] sm:$0x80] %vm423, %v421
      %v425 = vld [vmem:[#allocation3] sm:$0xff]
      %427 = vrot.lane.b32.xlu0 %v425, 64
      %v428 = vpop.permute.xlu0 %427
      %v430 = vmul.f32 %v418, %v428
      %v431 = vmul.f32 %v430, %v430
      %433 = vrot.lane.b32.xlu0 %v431, 64
      %v434 = vpop.permute.xlu0 %433
      %v436 = vsel %vm236, %v434, 0.0
      %437 = vadd.xlane.f32.xlu0 %v436
      %v438 = vpop.xlane.xlu0 %437
      %v439 = vmul.f32 %v438, 0.03125
      %v440 = vrsqrt.pop %v439
      %v441 = vmul.f32 %v439, %v440
      %vm442 = vcmp.eq.f32.partialorder %v439, inf
      %v443 = vsel %vm442, %v439, %v441
      %vm444 = vcmp.eq.f32.partialorder %v439, 0.0
      %v445 = vand.u32 %v439, 2147483648
      %v446 = vsel %vm444, %v445, %v443
      %v447 = vadd.f32 %v446, 1e-08
      %v448 = vrcp.pop %v447
      %v449 = vmul.f32 %v430, %v448
      %v450 = vld [vmem:[%s3] sm:$0xff]
      %v451 = vld [vmem:[%s3 + $0x8] sm:$0xff]
      %v452 = vld [vmem:[%s3 + $0x10] sm:$0xff]
      %v453 = vld [vmem:[%s3 + $0x18] sm:$0xff]
      %455 = vrot.lane.b32.xlu0 %v449, 64
      %v456 = vpop.permute.xlu0 %455
      %v457 = vsel %vm236, %v456, 0
      %459 = vmatprep.subr.mxu0 0.0
      %460 = vmatpush1.msra.mxu0 0.0
      %461 = vmatprep.subr.mxu0 0.0
      %462 = vmatpush1.msra.mxu0 0.0
      %463 = vmatprep.subr.mxu0 0.0
      %464 = vmatpush1.msra.mxu0 0.0
      %465 = vmatprep.subr.mxu0 0.0
      %466 = vmatpush1.msra.mxu0 0.0
      %467 = vmatprep.subr.mxu0 0.0
      %468 = vmatpush1.msra.mxu0 0.0
      %469 = vmatprep.subr.mxu0 0.0
      %470 = vmatpush1.msra.mxu0 0.0
      %471 = vmatprep.subr.mxu0 0.0
      %472 = vmatpush1.msra.mxu0 0.0
      %473 = vmatprep.subr.mxu0 0.0
      %474 = vmatpush1.msra.mxu0 0.0
      %475 = vmatprep.subr.mxu0 0.0
      %476 = vmatpush1.msra.mxu0 0.0
      %477 = vmatprep.subr.mxu0 0.0
      %478 = vmatpush1.msra.mxu0 0.0
      %479 = vmatprep.subr.mxu0 0.0
      %480 = vmatpush1.msra.mxu0 0.0
      %481 = vmatprep.subr.mxu0 0.0
      %482 = vmatpush1.msra.mxu0 0.0
      %483 = vmatprep.subr.mxu0 0.0
      %484 = vmatpush1.msra.mxu0 %v453
      %485 = vmatprep.subr.mxu0 0.0
      %486 = vmatpush1.msra.mxu0 %v452
      %487 = vmatprep.subr.mxu0 0.0
      %488 = vmatpush1.msra.mxu0 %v451
      %489 = vmatprep.subr.mxu0 0.0
      %490 = vmatpush1.msra.mxu0 %v450
      %491 = vmatprep.subr.mxu0 0.0
      %492 = vmatpush2.msra.mxu0 0.0
      %493 = vmatprep.subr.mxu0 0.0
      %494 = vmatpush2.msra.mxu0 0.0
      %495 = vmatprep.subr.mxu0 0.0
      %496 = vmatpush2.msra.mxu0 0.0
      %497 = vmatprep.subr.mxu0 0.0
      %498 = vmatpush2.msra.mxu0 0.0
      %499 = vmatprep.subr.mxu0 0.0
      %500 = vmatpush2.msra.mxu0 0.0
      %501 = vmatprep.subr.mxu0 0.0
      %502 = vmatpush2.msra.mxu0 0.0
      %503 = vmatprep.subr.mxu0 0.0
      %504 = vmatpush2.msra.mxu0 0.0
      %505 = vmatprep.subr.mxu0 0.0
      %506 = vmatpush2.msra.mxu0 0.0
      %507 = vmatprep.subr.mxu0 0.0
      %508 = vmatpush2.msra.mxu0 0.0
      %509 = vmatprep.subr.mxu0 0.0
      %510 = vmatpush2.msra.mxu0 0.0
      %511 = vmatprep.subr.mxu0 0.0
      %512 = vmatpush2.msra.mxu0 0.0
      %513 = vmatprep.subr.mxu0 0.0
      %514 = vmatpush2.msra.mxu0 0.0
      %515 = vmatprep.subr.mxu0 0.0
      %516 = vmatpush2.msra.mxu0 0.0
      %517 = vmatprep.subr.mxu0 0.0
      %518 = vmatpush2.msra.mxu0 0.0
      %519 = vmatprep.subr.mxu0 0.0
      %520 = vmatpush2.msra.mxu0 0.0
      %521 = vmatprep.subr.mxu0 0.0
      %522 = vmatpush2.msra.mxu0 0.0
      %523 = vmatprep.mubr.f32.mxu0 0.0
      %524 = vmatmul.mubr.f32.gmra.mxu0 %v457
      %v525 = vpop.f32.mrf.mxu0
      %v526 = vadd.f32 0.0, %v525
      %v527 = vpop.f32.mrf.mxu0
      %528 = vdwg.mxu0
      %529 = vst.msk [vmem:[%s224] sm:$0xff] %vm236, %v526
      %p530 = scmp.lt.s32.totalorder %s20, 1
      %s531 = scalar_select %p530, %s20, 1
      %p532 = scmp.lt.s32.totalorder %s21, 0
      %s533 = scalar_select %p532, %s21, 0
      %s534 = sadd.s32 %s533, %s531
      %s535 = smul.addr %s534, 8
      %s536 = scalar_lea.vmem %s4, %s535
      // Predicated region
      $region41: #{hgru_module_forward.1} parent=35 // pred_check
        %p537 = pneg %p139
      $region42: #{hgru_module_forward.1} parent=35 // pred_check_branch
        %539 = sbr.rel (%p537) target = $region44
      $region43: #{hgru_module_forward.1} parent=35 // pred_region
        _
      $region44: #{hgru_module_forward.1} parent=35 // pred_fallthru
        _
    $region36: #{hgru_module_forward.1} parent=5 // pred_fallthru
      _
    %p540 = scmp.le.s32.totalorder 2, %s11
    // Predicated region
    $region45: #{hgru_module_forward.1} parent=5 // pred_check
      %p541 = pneg %p540
    $region46: #{hgru_module_forward.1} parent=5 // pred_check_branch
      %543 = sbr.rel (%p541) target = $region48
    $region47: #{hgru_module_forward.1} parent=5 // pred_region
      %s544 = ssub.s32 %s11, 2
      // Predicated region
      $region49: #{hgru_module_forward.1} parent=47 // pred_check
        %p545 = pneg %p145
      $region50: #{hgru_module_forward.1} parent=47 // pred_check_branch
        %547 = sbr.rel (%p545) target = $region52
      $region51: #{hgru_module_forward.1} parent=47 // pred_region
        %p548 = scmp.lt.s32.totalorder %s22, 1
        %s549 = scalar_select %p548, %s22, 1
        %p550 = scmp.lt.s32.totalorder %s23, 0
        %s551 = scalar_select %p550, %s23, 0
        %s552 = sadd.s32 %s551, %s549
        %s553 = smul.addr %s552, 8
        %s554 = scalar_lea.vmem %s4, %s553
      $region52: #{hgru_module_forward.1} parent=47 // pred_fallthru
        _
    $region48: #{hgru_module_forward.1} parent=5 // pred_fallthru
      _
  $region6: #{hgru_module_forward.1} parent=0 // loop_footer
    %s15 = sadd.s32 1, %s11
  $region7: #{hgru_module_forward.1} parent=0 // loop_footer_branch
    %10 = sbr.rel target = $region3
  $region8: #{hgru_module_forward.1} parent=0 // loop_exit
    _

</llo_original>
